<compile_context>
chip_gen: v5e
topology: v5e:2x2
jax: 0.10.0
libtpu: 0.0.40
codegen_flags: <defaults>
</compile_context>

<pallas_src>
import jax
import jax.numpy as jnp
from jax import lax
from jax.experimental import pallas as pl
from jax.experimental.pallas import tpu as pltpu


NEG_SLOPE = 0.3  # LeakyReLU(0.3)


def _residual_block_kernel(x_ref, w1_ref, b1_ref, w2_ref, b2_ref, ws_ref, bs_ref,
                           o_ref):
    """One batch-block per grid step.

    x_ref : (Nb, H, W*Cin)       VMEM, lane-dense input
    w1_ref: (3, W*Cin, W*Cout)   block-circulant conv1 weights, one matrix per dh
    b1_ref: (1, W*Cout)          bias tiled across W
    w2_ref: (3, W*Cout, W*Cout)  block-circulant conv2 weights
    b2_ref: (1, W*Cout)
    ws_ref: (W*Cin, W*Cout)      block-diagonal 1x1 shortcut weight
    bs_ref: (1, W*Cout)
    o_ref : (Nb, H, W*Cout)      VMEM, lane-dense output
    """
    nb, H, k_in = x_ref.shape
    k_out = o_ref.shape[-1]
    rows = nb * H

    x3 = x_ref[...].astype(jnp.float32)              # (Nb, H, W*Cin)
    x2 = x3.reshape(rows, k_in)                      # layout-free merge of (Nb, H)

    def leaky(z):
        return jnp.where(z > 0, z, NEG_SLOPE * z)

    def conv3x3(v3, w_ref, b_ref):
        # v3: (Nb, H, K).  out[i] = v[i-1] @ W[0] + v[i] @ W[1] + v[i+1] @ W[2],
        # with zero rows outside each image (zero H padding).  The circular W
        # padding is already folded into the block-circulant weights, so no lane
        # shifts / im2col are needed.
        k = v3.shape[-1]
        v2 = v3.reshape(rows, k)
        zrow = jnp.zeros((nb, 1, k), jnp.float32)
        prev = jnp.concatenate([zrow, v3[:, :H - 1, :]], axis=1).reshape(rows, k)
        nxt = jnp.concatenate([v3[:, 1:, :], zrow], axis=1).reshape(rows, k)
        acc = jnp.dot(v2, w_ref[1], preferred_element_type=jnp.float32)
        acc += jnp.dot(prev, w_ref[0], preferred_element_type=jnp.float32)
        acc += jnp.dot(nxt, w_ref[2], preferred_element_type=jnp.float32)
        return acc + b_ref[...]

    # h = drop(norm1(act(conv1(x))))   (norm = Identity, drop = Identity / eval)
    h = leaky(conv3x3(x3, w1_ref, b1_ref))
    # h = drop(norm2(act(conv2(h))))
    h = leaky(conv3x3(h.reshape(nb, H, k_out), w2_ref, b2_ref))
    # shortcut: 1x1 conv == block-diagonal matmul in the flattened layout
    sc = jnp.dot(x2, ws_ref[...], preferred_element_type=jnp.float32) + bs_ref[...]
    o_ref[...] = (h + sc).reshape(nb, H, k_out).astype(o_ref.dtype)


# ----------------------- wrapper-side weight preparation ----------------------
def _circulant_conv_weight(w_hwio, w_spatial):
    """(3, 3, Cin, Cout) HWIO -> (3, W*Cin, W*Cout) block-circulant along W.

    Folds the circular-W padding into the weight so each kernel row dh becomes a
    single dense matmul over the flattened (W*Cin) axis.
    """
    kh, kw, cin, cout = w_hwio.shape
    eye = jnp.eye(w_spatial, dtype=w_hwio.dtype)
    out = jnp.zeros((kh, w_spatial * cin, w_spatial * cout), w_hwio.dtype)
    for b in range(kw):
        dw = b - kw // 2
        # perm[j', j] == 1  iff  j' == (j + dw) mod W
        perm = jnp.roll(eye, -dw, axis=1)
        blk = jnp.einsum("JK,aio->aJiKo", perm, w_hwio[:, b])
        out = out + blk.reshape(kh, w_spatial * cin, w_spatial * cout)
    return out


def _blockdiag_weight(ws, w_spatial):
    """(Cin, Cout) 1x1 conv -> (W*Cin, W*Cout) block-diagonal matrix."""
    cin, cout = ws.shape
    eye = jnp.eye(w_spatial, dtype=ws.dtype)
    return jnp.einsum("JK,io->JiKo", eye, ws).reshape(w_spatial * cin,
                                                      w_spatial * cout)


def _pick_batch_block(n, per_image_bytes, target_bytes=4 << 20):
    """Images per grid step: large enough to amortize the ~0.35us per-step cost,
    small enough to keep the block a few MiB, and leaving >= 2 grid steps so
    megacore / 2-TC chips get parallel work."""
    if n <= 1:
        return 1
    nb = min(n // 2, max(1, target_bytes // max(per_image_bytes, 1)))
    nb = max(nb, 1)
    while n % nb:
        nb -= 1
    return nb


@jax.jit
def residual_block_pallas(x_nhwc, w1_hwio, b1, w2_hwio, b2, ws, bs):
    N, H, W, Cin = x_nhwc.shape
    Cout = w1_hwio.shape[-1]
    k_in, k_out = W * Cin, W * Cout

    # Lane-dense flat views + one-time weight/bias prep (outside the kernel).
    x_flat = x_nhwc.reshape(N, H, k_in)
    w1_big = _circulant_conv_weight(w1_hwio, W)          # (3, W*Cin,  W*Cout)
    w2_big = _circulant_conv_weight(w2_hwio, W)          # (3, W*Cout, W*Cout)
    ws_big = _blockdiag_weight(ws, W)                    # (W*Cin, W*Cout)
    b1_row = jnp.tile(b1, W).reshape(1, k_out)
    b2_row = jnp.tile(b2, W).reshape(1, k_out)
    bs_row = jnp.tile(bs, W).reshape(1, k_out)

    per_image_bytes = H * (4 * k_in + 8 * k_out) * x_nhwc.dtype.itemsize
    nb = _pick_batch_block(N, per_image_bytes)

    out_flat = pl.pallas_call(
        _residual_block_kernel,
        out_shape=jax.ShapeDtypeStruct((N, H, k_out), x_nhwc.dtype),
        grid_spec=pltpu.PrefetchScalarGridSpec(
            num_scalar_prefetch=0,
            grid=(N // nb,),
            in_specs=[
                pl.BlockSpec((nb, H, k_in), lambda n: (n, 0, 0)),
                pl.BlockSpec((3, k_in, k_out), lambda n: (0, 0, 0)),
                pl.BlockSpec((1, k_out), lambda n: (0, 0)),
                pl.BlockSpec((3, k_out, k_out), lambda n: (0, 0, 0)),
                pl.BlockSpec((1, k_out), lambda n: (0, 0)),
                pl.BlockSpec((k_in, k_out), lambda n: (0, 0)),
                pl.BlockSpec((1, k_out), lambda n: (0, 0)),
            ],
            out_specs=pl.BlockSpec((nb, H, k_out), lambda n: (n, 0, 0)),
        ),
        compiler_params=pltpu.CompilerParams(
            dimension_semantics=("parallel",)),
    )(x_flat, w1_big, b1_row, w2_big, b2_row, ws_big, bs_row)

    return out_flat.reshape(N, H, W, Cout)


# ---------------- pure-JAX reference (independent path, for verification) -----
def _periodic_conv3x3_ref(x_nhwc, w_hwio, b):
    xp = jnp.pad(x_nhwc, ((0, 0), (0, 0), (1, 1), (0, 0)), mode="wrap")   # W circular
    xp = jnp.pad(xp, ((0, 0), (1, 1), (0, 0), (0, 0)))                    # H zeros
    out = lax.conv_general_dilated(
        xp, w_hwio, window_strides=(1, 1), padding="VALID",
        dimension_numbers=("NHWC", "HWIO", "NHWC"))
    return out + b.reshape(1, 1, 1, -1)


def residual_block_ref(x_nhwc, w1, b1, w2, b2, ws, bs):
    def leaky(z):
        return jnp.where(z > 0, z, NEG_SLOPE * z)
    h = leaky(_periodic_conv3x3_ref(x_nhwc, w1, b1))
    h = leaky(_periodic_conv3x3_ref(h, w2, b2))
    sc = jnp.einsum("nhwc,co->nhwo", x_nhwc, ws) + bs.reshape(1, 1, 1, -1)
    return h + sc


if __name__ == "__main__":
    N, Cin, Cout, H, W = 2, 4, 8, 16, 16

    key = jax.random.PRNGKey(0)
    kx, k1, k2, k3, k4, k5, k6 = jax.random.split(key, 7)

    # PyTorch-convention NCHW input, transposed to NHWC for the kernel.
    x_nchw = jax.random.normal(kx, (N, Cin, H, W), dtype=jnp.float32)
    x_nhwc = jnp.transpose(x_nchw, (0, 2, 3, 1))

    # Deterministic synthetic parameters (conv weights in HWIO).
    w1 = 0.1 * jax.random.normal(k1, (3, 3, Cin, Cout), dtype=jnp.float32)
    b1 = 0.1 * jax.random.normal(k2, (Cout,), dtype=jnp.float32)
    w2 = 0.1 * jax.random.normal(k3, (3, 3, Cout, Cout), dtype=jnp.float32)
    b2 = 0.1 * jax.random.normal(k4, (Cout,), dtype=jnp.float32)
    ws = 0.1 * jax.random.normal(k5, (Cin, Cout), dtype=jnp.float32)   # 1x1 shortcut
    bs = 0.1 * jax.random.normal(k6, (Cout,), dtype=jnp.float32)

    out = residual_block_pallas(x_nhwc, w1, b1, w2, b2, ws, bs)
    out = jax.block_until_ready(out)

    ref = residual_block_ref(x_nhwc, w1, b1, w2, b2, ws, bs)
    assert out.shape == (N, H, W, Cout)
    assert jnp.allclose(out, ref, atol=1e-4, rtol=1e-4), float(
        jnp.max(jnp.abs(out - ref)))

    print("KERNEL_OK")
</pallas_src>

<mosaic_0001>
module attributes {stable_mosaic.version = 11 : i64} {
  func.func @_residual_block_kernel(%arg0: i32, %arg1: memref<1x16x64xf32, #tpu.memory_space<vmem>>, %arg2: memref<3x64x128xf32, #tpu.memory_space<vmem>>, %arg3: memref<1x128xf32, #tpu.memory_space<vmem>>, %arg4: memref<3x128x128xf32, #tpu.memory_space<vmem>>, %arg5: memref<1x128xf32, #tpu.memory_space<vmem>>, %arg6: memref<64x128xf32, #tpu.memory_space<vmem>>, %arg7: memref<1x128xf32, #tpu.memory_space<vmem>>, %arg8: memref<1x16x128xf32, #tpu.memory_space<vmem>>) attributes {dimension_semantics = [#tpu.dimension_semantics<parallel>], iteration_bounds = array<i64: 2>, scalar_prefetch = 0 : i64, scratch_operands = 0 : i64, tpu.core_type = #tpu.core_type<tc>, window_params = [{transform_indices = @transform_0, window_bounds = array<i64: 1, 16, 64>}, {pipeline_mode = #tpu.pipeline_mode<synchronous>, transform_indices = @transform_1, window_bounds = array<i64: 3, 64, 128>}, {pipeline_mode = #tpu.pipeline_mode<synchronous>, transform_indices = @transform_2, window_bounds = array<i64: 1, 128>}, {pipeline_mode = #tpu.pipeline_mode<synchronous>, transform_indices = @transform_3, window_bounds = array<i64: 3, 128, 128>}, {pipeline_mode = #tpu.pipeline_mode<synchronous>, transform_indices = @transform_4, window_bounds = array<i64: 1, 128>}, {pipeline_mode = #tpu.pipeline_mode<synchronous>, transform_indices = @transform_5, window_bounds = array<i64: 64, 128>}, {pipeline_mode = #tpu.pipeline_mode<synchronous>, transform_indices = @transform_6, window_bounds = array<i64: 1, 128>}, {transform_indices = @transform_7, window_bounds = array<i64: 1, 16, 128>}]} {
    %c0 = arith.constant 0 : index
    %c0_0 = arith.constant 0 : index
    %c0_1 = arith.constant 0 : index
    %0 = vector.load %arg1[%c0, %c0_0, %c0_1] : memref<1x16x64xf32, #tpu.memory_space<vmem>>, vector<1x16x64xf32>
    %1 = vector.shape_cast %0 : vector<1x16x64xf32> to vector<16x64xf32>
    %2 = vector.shape_cast %0 : vector<1x16x64xf32> to vector<16x64xf32>
    %cst = arith.constant 0.000000e+00 : f32
    %3 = vector.broadcast %cst : f32 to vector<1x1x64xf32>
    %4 = vector.extract_strided_slice %0 {offsets = [0, 0, 0], sizes = [1, 15, 64], strides = [1, 1, 1]} : vector<1x16x64xf32> to vector<1x15x64xf32>
    %5 = tpu.concatenate %3, %4 in 1 : vector<1x1x64xf32>, vector<1x15x64xf32> -> vector<1x16x64xf32>
    %6 = vector.shape_cast %5 : vector<1x16x64xf32> to vector<16x64xf32>
    %7 = vector.extract_strided_slice %0 {offsets = [0, 1, 0], sizes = [1, 15, 64], strides = [1, 1, 1]} : vector<1x16x64xf32> to vector<1x15x64xf32>
    %8 = tpu.concatenate %7, %3 in 1 : vector<1x15x64xf32>, vector<1x1x64xf32> -> vector<1x16x64xf32>
    %9 = vector.shape_cast %8 : vector<1x16x64xf32> to vector<16x64xf32>
    %c1 = arith.constant 1 : index
    %c0_2 = arith.constant 0 : index
    %c0_3 = arith.constant 0 : index
    %10 = vector.load %arg2[%c1, %c0_2, %c0_3] : memref<3x64x128xf32, #tpu.memory_space<vmem>>, vector<1x64x128xf32>
    %11 = vector.shape_cast %10 : vector<1x64x128xf32> to vector<64x128xf32>
    %cst_4 = arith.constant dense<0.000000e+00> : vector<16x128xf32>
    %12 = tpu.matmul %2, %11, %cst_4 {dimension_numbers = #tpu.dot_dimension_numbers<[1], [0], [0], [1], [0, 0, 1, 1], [], []>} : vector<16x64xf32>, vector<64x128xf32>, vector<16x128xf32> -> vector<16x128xf32>
    %c0_5 = arith.constant 0 : index
    %c0_6 = arith.constant 0 : index
    %c0_7 = arith.constant 0 : index
    %13 = vector.load %arg2[%c0_5, %c0_6, %c0_7] : memref<3x64x128xf32, #tpu.memory_space<vmem>>, vector<1x64x128xf32>
    %14 = vector.shape_cast %13 : vector<1x64x128xf32> to vector<64x128xf32>
    %cst_8 = arith.constant dense<0.000000e+00> : vector<16x128xf32>
    %15 = tpu.matmul %6, %14, %cst_8 {dimension_numbers = #tpu.dot_dimension_numbers<[1], [0], [0], [1], [0, 0, 1, 1], [], []>} : vector<16x64xf32>, vector<64x128xf32>, vector<16x128xf32> -> vector<16x128xf32>
    %16 = arith.addf %12, %15 : vector<16x128xf32>
    %c2 = arith.constant 2 : index
    %c0_9 = arith.constant 0 : index
    %c0_10 = arith.constant 0 : index
    %17 = vector.load %arg2[%c2, %c0_9, %c0_10] : memref<3x64x128xf32, #tpu.memory_space<vmem>>, vector<1x64x128xf32>
    %18 = vector.shape_cast %17 : vector<1x64x128xf32> to vector<64x128xf32>
    %cst_11 = arith.constant dense<0.000000e+00> : vector<16x128xf32>
    %19 = tpu.matmul %9, %18, %cst_11 {dimension_numbers = #tpu.dot_dimension_numbers<[1], [0], [0], [1], [0, 0, 1, 1], [], []>} : vector<16x64xf32>, vector<64x128xf32>, vector<16x128xf32> -> vector<16x128xf32>
    %20 = arith.addf %16, %19 : vector<16x128xf32>
    %c0_12 = arith.constant 0 : index
    %c0_13 = arith.constant 0 : index
    %21 = vector.load %arg3[%c0_12, %c0_13] : memref<1x128xf32, #tpu.memory_space<vmem>>, vector<1x128xf32>
    %22 = vector.broadcast %21 : vector<1x128xf32> to vector<16x128xf32>
    %23 = arith.addf %20, %22 : vector<16x128xf32>
    %cst_14 = arith.constant 0.000000e+00 : f32
    %24 = vector.broadcast %cst_14 : f32 to vector<16x128xf32>
    %25 = arith.cmpf ogt, %23, %24 : vector<16x128xf32>
    %cst_15 = arith.constant 3.000000e-01 : f32
    %26 = vector.broadcast %cst_15 : f32 to vector<16x128xf32>
    %27 = arith.mulf %26, %23 : vector<16x128xf32>
    %28 = arith.select %25, %23, %27 : vector<16x128xi1>, vector<16x128xf32>
    %29 = vector.shape_cast %28 : vector<16x128xf32> to vector<1x16x128xf32>
    %30 = vector.shape_cast %29 : vector<1x16x128xf32> to vector<16x128xf32>
    %cst_16 = arith.constant 0.000000e+00 : f32
    %31 = vector.broadcast %cst_16 : f32 to vector<1x1x128xf32>
    %32 = vector.extract_strided_slice %29 {offsets = [0, 0, 0], sizes = [1, 15, 128], strides = [1, 1, 1]} : vector<1x16x128xf32> to vector<1x15x128xf32>
    %33 = tpu.concatenate %31, %32 in 1 : vector<1x1x128xf32>, vector<1x15x128xf32> -> vector<1x16x128xf32>
    %34 = vector.shape_cast %33 : vector<1x16x128xf32> to vector<16x128xf32>
    %35 = vector.extract_strided_slice %29 {offsets = [0, 1, 0], sizes = [1, 15, 128], strides = [1, 1, 1]} : vector<1x16x128xf32> to vector<1x15x128xf32>
    %36 = tpu.concatenate %35, %31 in 1 : vector<1x15x128xf32>, vector<1x1x128xf32> -> vector<1x16x128xf32>
    %37 = vector.shape_cast %36 : vector<1x16x128xf32> to vector<16x128xf32>
    %c1_17 = arith.constant 1 : index
    %c0_18 = arith.constant 0 : index
    %c0_19 = arith.constant 0 : index
    %38 = vector.load %arg4[%c1_17, %c0_18, %c0_19] : memref<3x128x128xf32, #tpu.memory_space<vmem>>, vector<1x128x128xf32>
    %39 = vector.shape_cast %38 : vector<1x128x128xf32> to vector<128x128xf32>
    %cst_20 = arith.constant dense<0.000000e+00> : vector<16x128xf32>
    %40 = tpu.matmul %30, %39, %cst_20 {dimension_numbers = #tpu.dot_dimension_numbers<[1], [0], [0], [1], [0, 0, 1, 1], [], []>} : vector<16x128xf32>, vector<128x128xf32>, vector<16x128xf32> -> vector<16x128xf32>
    %c0_21 = arith.constant 0 : index
    %c0_22 = arith.constant 0 : index
    %c0_23 = arith.constant 0 : index
    %41 = vector.load %arg4[%c0_21, %c0_22, %c0_23] : memref<3x128x128xf32, #tpu.memory_space<vmem>>, vector<1x128x128xf32>
    %42 = vector.shape_cast %41 : vector<1x128x128xf32> to vector<128x128xf32>
    %cst_24 = arith.constant dense<0.000000e+00> : vector<16x128xf32>
    %43 = tpu.matmul %34, %42, %cst_24 {dimension_numbers = #tpu.dot_dimension_numbers<[1], [0], [0], [1], [0, 0, 1, 1], [], []>} : vector<16x128xf32>, vector<128x128xf32>, vector<16x128xf32> -> vector<16x128xf32>
    %44 = arith.addf %40, %43 : vector<16x128xf32>
    %c2_25 = arith.constant 2 : index
    %c0_26 = arith.constant 0 : index
    %c0_27 = arith.constant 0 : index
    %45 = vector.load %arg4[%c2_25, %c0_26, %c0_27] : memref<3x128x128xf32, #tpu.memory_space<vmem>>, vector<1x128x128xf32>
    %46 = vector.shape_cast %45 : vector<1x128x128xf32> to vector<128x128xf32>
    %cst_28 = arith.constant dense<0.000000e+00> : vector<16x128xf32>
    %47 = tpu.matmul %37, %46, %cst_28 {dimension_numbers = #tpu.dot_dimension_numbers<[1], [0], [0], [1], [0, 0, 1, 1], [], []>} : vector<16x128xf32>, vector<128x128xf32>, vector<16x128xf32> -> vector<16x128xf32>
    %48 = arith.addf %44, %47 : vector<16x128xf32>
    %c0_29 = arith.constant 0 : index
    %c0_30 = arith.constant 0 : index
    %49 = vector.load %arg5[%c0_29, %c0_30] : memref<1x128xf32, #tpu.memory_space<vmem>>, vector<1x128xf32>
    %50 = vector.broadcast %49 : vector<1x128xf32> to vector<16x128xf32>
    %51 = arith.addf %48, %50 : vector<16x128xf32>
    %cst_31 = arith.constant 0.000000e+00 : f32
    %52 = vector.broadcast %cst_31 : f32 to vector<16x128xf32>
    %53 = arith.cmpf ogt, %51, %52 : vector<16x128xf32>
    %cst_32 = arith.constant 3.000000e-01 : f32
    %54 = vector.broadcast %cst_32 : f32 to vector<16x128xf32>
    %55 = arith.mulf %54, %51 : vector<16x128xf32>
    %56 = arith.select %53, %51, %55 : vector<16x128xi1>, vector<16x128xf32>
    %c0_33 = arith.constant 0 : index
    %c0_34 = arith.constant 0 : index
    %57 = vector.load %arg6[%c0_33, %c0_34] : memref<64x128xf32, #tpu.memory_space<vmem>>, vector<64x128xf32>
    %cst_35 = arith.constant dense<0.000000e+00> : vector<16x128xf32>
    %58 = tpu.matmul %1, %57, %cst_35 {dimension_numbers = #tpu.dot_dimension_numbers<[1], [0], [0], [1], [0, 0, 1, 1], [], []>} : vector<16x64xf32>, vector<64x128xf32>, vector<16x128xf32> -> vector<16x128xf32>
    %c0_36 = arith.constant 0 : index
    %c0_37 = arith.constant 0 : index
    %59 = vector.load %arg7[%c0_36, %c0_37] : memref<1x128xf32, #tpu.memory_space<vmem>>, vector<1x128xf32>
    %60 = vector.broadcast %59 : vector<1x128xf32> to vector<16x128xf32>
    %61 = arith.addf %58, %60 : vector<16x128xf32>
    %62 = arith.addf %56, %61 : vector<16x128xf32>
    %63 = vector.shape_cast %62 : vector<16x128xf32> to vector<1x16x128xf32>
    %c0_38 = arith.constant 0 : index
    %c0_39 = arith.constant 0 : index
    %c0_40 = arith.constant 0 : index
    %64 = vector.load %arg8[%c0_38, %c0_39, %c0_40] : memref<1x16x128xf32, #tpu.memory_space<vmem>>, vector<1x16x128xf32>
    tpu.vector_store %arg8[%c0_38, %c0_39, %c0_40], %63 {strides = array<i32>} : memref<1x16x128xf32, #tpu.memory_space<vmem>>, vector<1x16x128xf32>,
    return
  }
  func.func @transform_0(%arg0: i32) -> (i32, i32, i32) {
    %c0_i32 = arith.constant 0 : i32
    %c0_i32_0 = arith.constant 0 : i32
    %c0_i32_1 = arith.constant 0 : i32
    return %arg0, %c0_i32, %c0_i32_0 : i32, i32, i32
  }
  func.func @transform_1(%arg0: i32) -> (i32, i32, i32) {
    %c0_i32 = arith.constant 0 : i32
    %c0_i32_0 = arith.constant 0 : i32
    %c0_i32_1 = arith.constant 0 : i32
    %c0_i32_2 = arith.constant 0 : i32
    return %c0_i32, %c0_i32_0, %c0_i32_1 : i32, i32, i32
  }
  func.func @transform_2(%arg0: i32) -> (i32, i32) {
    %c0_i32 = arith.constant 0 : i32
    %c0_i32_0 = arith.constant 0 : i32
    %c0_i32_1 = arith.constant 0 : i32
    return %c0_i32, %c0_i32_0 : i32, i32
  }
  func.func @transform_3(%arg0: i32) -> (i32, i32, i32) {
    %c0_i32 = arith.constant 0 : i32
    %c0_i32_0 = arith.constant 0 : i32
    %c0_i32_1 = arith.constant 0 : i32
    %c0_i32_2 = arith.constant 0 : i32
    return %c0_i32, %c0_i32_0, %c0_i32_1 : i32, i32, i32
  }
  func.func @transform_4(%arg0: i32) -> (i32, i32) {
    %c0_i32 = arith.constant 0 : i32
    %c0_i32_0 = arith.constant 0 : i32
    %c0_i32_1 = arith.constant 0 : i32
    return %c0_i32, %c0_i32_0 : i32, i32
  }
  func.func @transform_5(%arg0: i32) -> (i32, i32) {
    %c0_i32 = arith.constant 0 : i32
    %c0_i32_0 = arith.constant 0 : i32
    %c0_i32_1 = arith.constant 0 : i32
    return %c0_i32, %c0_i32_0 : i32, i32
  }
  func.func @transform_6(%arg0: i32) -> (i32, i32) {
    %c0_i32 = arith.constant 0 : i32
    %c0_i32_0 = arith.constant 0 : i32
    %c0_i32_1 = arith.constant 0 : i32
    return %c0_i32, %c0_i32_0 : i32, i32
  }
  func.func @transform_7(%arg0: i32) -> (i32, i32, i32) {
    %c0_i32 = arith.constant 0 : i32
    %c0_i32_0 = arith.constant 0 : i32
    %c0_i32_1 = arith.constant 0 : i32
    return %arg0, %c0_i32, %c0_i32_0 : i32, i32, i32
  }
}

</mosaic_0001>

<llo_original>
// kernel: tile.18
$region0: #{tile.18}
  #allocation0 [shape = 's32[1]{0}', space=sflag, size = 0x4, scoped, tag = 'scoped memory for tile.18']
  %s0 = inlined_call_operand.vmem [shape: f32[8], index: 0, kind: input, shape index: {}]
  %s1 = inlined_call_operand.vmem [shape: f32[16,8], index: 1, kind: output, shape index: {}]
  // Predicated region
  $region2: #{tile.18} parent=0 // pred_check
    _
  $region3: #{tile.18} parent=0 // pred_check_branch
    %3 = sbr.rel (0) target = $region5
  $region4: #{tile.18} parent=0 // pred_region
    _
  $region5: #{tile.18} parent=0 // pred_fallthru
    _
  %v4 = vld [vmem:[%s0] ss:$0 sm:$0xff]
  %5 = vst [vmem:[%s1] sm:$0xff] %v4
  %s6 = scalar_lea.vmem %s1, 8
  %7 = vst [vmem:[%s6] sm:$0xff] %v4

// kernel: tile.19
$region0: #{tile.19}
  %s0 = inlined_call_operand.vmem [shape: f32[16,8], index: 0, kind: input, shape index: {}]
  %s1 = inlined_call_operand.vmem [shape: f32[1,128], index: 1, kind: output, shape index: {}]
  $region1: #{tile.19} parent=0
    #allocation0 [shape = 'u8[4096]{0}', space=vmem, size = 0x1000, scoped, tag = 'scoped mem for output reshape']
    %v2 = vld [vmem:[%s0] sm:$0x1]
    %vm3 = vcmask 64512
    %4 = vst.msk [vmem:[#allocation0] sm:$0x1] %vm3, %v2
    %s5 = scalar_lea.vmem %s0, 15
    %v6 = vld [vmem:[%s5] sm:$0x1]
    %7 = vrot.lane.b32.xlu0 %v6, 120
    %v8 = vpop.permute.xlu0 %7
    %vm9 = vcmask 1048512
    %10 = vst.msk [vmem:[#allocation0] sm:$0x1] %vm9, %v8
    %s11 = scalar_lea.vmem %s0, 14
    %v12 = vld [vmem:[%s11] sm:$0x1]
    %13 = vrot.lane.b32.xlu0 %v12, 112
    %v14 = vpop.permute.xlu0 %13
    %vm15 = vcmask 982912
    %16 = vst.msk [vmem:[#allocation0] sm:$0x1] %vm15, %v14
    %s17 = scalar_lea.vmem %s0, 13
    %v18 = vld [vmem:[%s17] sm:$0x1]
    %19 = vrot.lane.b32.xlu0 %v18, 104
    %v20 = vpop.permute.xlu0 %19
    %vm21 = vcmask 917312
    %22 = vst.msk [vmem:[#allocation0] sm:$0x1] %vm21, %v20
    %s23 = scalar_lea.vmem %s0, 12
    %v24 = vld [vmem:[%s23] sm:$0x1]
    %25 = vrot.lane.b32.xlu0 %v24, 96
    %v26 = vpop.permute.xlu0 %25
    %vm27 = vcmask 851712
    %28 = vst.msk [vmem:[#allocation0] sm:$0x1] %vm27, %v26
    %s29 = scalar_lea.vmem %s0, 11
    %v30 = vld [vmem:[%s29] sm:$0x1]
    %31 = vrot.lane.b32.xlu0 %v30, 88
    %v32 = vpop.permute.xlu0 %31
    %vm33 = vcmask 786112
    %34 = vst.msk [vmem:[#allocation0] sm:$0x1] %vm33, %v32
    %s35 = scalar_lea.vmem %s0, 10
    %v36 = vld [vmem:[%s35] sm:$0x1]
    %37 = vrot.lane.b32.xlu0 %v36, 80
    %v38 = vpop.permute.xlu0 %37
    %vm39 = vcmask 720512
    %40 = vst.msk [vmem:[#allocation0] sm:$0x1] %vm39, %v38
    %s41 = scalar_lea.vmem %s0, 9
    %v42 = vld [vmem:[%s41] sm:$0x1]
    %43 = vrot.lane.b32.xlu0 %v42, 72
    %v44 = vpop.permute.xlu0 %43
    %vm45 = vcmask 654912
    %46 = vst.msk [vmem:[#allocation0] sm:$0x1] %vm45, %v44
    %s47 = scalar_lea.vmem %s0, 8
    %v48 = vld [vmem:[%s47] sm:$0x1]
    %49 = vrot.lane.b32.xlu0 %v48, 64
    %v50 = vpop.permute.xlu0 %49
    %vm51 = vcmask 589312
    %52 = vst.msk [vmem:[#allocation0] sm:$0x1] %vm51, %v50
    %s53 = scalar_lea.vmem %s0, 7
    %v54 = vld [vmem:[%s53] sm:$0x1]
    %55 = vrot.lane.b32.xlu0 %v54, 56
    %v56 = vpop.permute.xlu0 %55
    %vm57 = vcmask 523712
    %58 = vst.msk [vmem:[#allocation0] sm:$0x1] %vm57, %v56
    %s59 = scalar_lea.vmem %s0, 6
    %v60 = vld [vmem:[%s59] sm:$0x1]
    %61 = vrot.lane.b32.xlu0 %v60, 48
    %v62 = vpop.permute.xlu0 %61
    %vm63 = vcmask 458112
    %64 = vst.msk [vmem:[#allocation0] sm:$0x1] %vm63, %v62
    %s65 = scalar_lea.vmem %s0, 5
    %v66 = vld [vmem:[%s65] sm:$0x1]
    %67 = vrot.lane.b32.xlu0 %v66, 40
    %v68 = vpop.permute.xlu0 %67
    %vm69 = vcmask 392512
    %70 = vst.msk [vmem:[#allocation0] sm:$0x1] %vm69, %v68
    %s71 = scalar_lea.vmem %s0, 4
    %v72 = vld [vmem:[%s71] sm:$0x1]
    %73 = vrot.lane.b32.xlu0 %v72, 32
    %v74 = vpop.permute.xlu0 %73
    %vm75 = vcmask 326912
    %76 = vst.msk [vmem:[#allocation0] sm:$0x1] %vm75, %v74
    %s77 = scalar_lea.vmem %s0, 3
    %v78 = vld [vmem:[%s77] sm:$0x1]
    %79 = vrot.lane.b32.xlu0 %v78, 24
    %v80 = vpop.permute.xlu0 %79
    %vm81 = vcmask 261312
    %82 = vst.msk [vmem:[#allocation0] sm:$0x1] %vm81, %v80
    %s83 = scalar_lea.vmem %s0, 2
    %v84 = vld [vmem:[%s83] sm:$0x1]
    %85 = vrot.lane.b32.xlu0 %v84, 16
    %v86 = vpop.permute.xlu0 %85
    %vm87 = vcmask 195712
    %88 = vst.msk [vmem:[#allocation0] sm:$0x1] %vm87, %v86
    %s89 = scalar_lea.vmem %s0, 1
    %v90 = vld [vmem:[%s89] sm:$0x1]
    %91 = vrot.lane.b32.xlu0 %v90, 8
    %v92 = vpop.permute.xlu0 %91
    %vm93 = vcmask 130112
    %94 = vst.msk [vmem:[#allocation0] sm:$0x1] %vm93, %v92
    %s96 = ssub.s32 2, 1
    %v97 = vld [vmem:[#allocation0] sm:%s96]
    %s99 = ssub.s32 2, 1
    %100 = vst [vmem:[%s1] sm:%s99] %v97

// kernel: residual_block_pallas.1
$region0: #{residual_block_pallas.1}
  #allocation0 [shape = 'u32[]', space=smem, size = 0x4, offset = 0x4, fixed_abs, tag = 'smem constant byte address 0x4 - core index']
  #allocation1 [shape = 'u32[72,128]{1,0:T(1,128)}', space=vmem, size = 0x9000, scoped, tag = 'internal scratch']
  %s0 = inlined_call_operand.vmem [shape: f32[2,16,64], index: 0, kind: input, shape index: {}]
  %s1 = inlined_call_operand.vmem [shape: f32[3,64,128], index: 1, kind: input, shape index: {}]
  %s2 = inlined_call_operand.vmem [shape: f32[1,128], index: 2, kind: input, shape index: {}]
  %s3 = inlined_call_operand.vmem [shape: f32[3,128,128], index: 3, kind: input, shape index: {}]
  %s4 = inlined_call_operand.vmem [shape: f32[1,128], index: 4, kind: input, shape index: {}]
  %s5 = inlined_call_operand.vmem [shape: f32[64,128], index: 5, kind: input, shape index: {}]
  %s6 = inlined_call_operand.vmem [shape: f32[1,128], index: 6, kind: input, shape index: {}]
  %s7 = inlined_call_operand.vmem [shape: f32[2,16,128], index: 7, kind: output, shape index: {}]
  %s8 = sld [smem:[#allocation0]]
  $region61: #{residual_block_pallas.1} parent=0
    _
  %s10 = ssub.s32 1, %s8
  %s11 = scalar_select 0, %s10, %s8
  loop: start=0, step=1, limit=4
  $region2: #{residual_block_pallas.1} parent=0 // loop_pre_header
    _
  $region3: #{residual_block_pallas.1} parent=0 // loop_header
    %s13 = sphi 0, %s17
    %p14 = scmp.ge.s32.totalorder %s13, 4
    %s23 = sphi 0, %s25
    %s26 = sphi 0, %s23
    %s27 = sphi 0, %s26
    %s43 = sphi 0, %s27
    %s47 = sphi 0, %s47
    %s49 = sphi 0, %s47
    %s50 = sphi 0, %s49
    %s64 = sphi 0, %s50
    %s68 = sphi 0, %s68
    %s70 = sphi 0, %s68
    %s71 = sphi 0, %s70
    %s85 = sphi 0, %s71
    %s89 = sphi 0, %s89
    %s91 = sphi 0, %s89
    %s92 = sphi 0, %s91
    %s106 = sphi 0, %s92
    %s110 = sphi 0, %s110
    %s112 = sphi 0, %s110
    %s113 = sphi 0, %s112
    %s127 = sphi 0, %s113
    %s131 = sphi 0, %s131
    %s133 = sphi 0, %s131
    %s134 = sphi 0, %s133
    %s148 = sphi 0, %s134
    %s152 = sphi 0, %s152
    %s154 = sphi 0, %s152
    %s155 = sphi 0, %s154
    %s169 = sphi 0, %s155
    %s175 = sphi 0, %s177
    %s178 = sphi 0, %s175
    %s179 = sphi 0, %s178
    %s195 = sphi 0, %s179
  $region4: #{residual_block_pallas.1} parent=0 // loop_header_branch
    %16 = sbr.rel (%p14) target = $region8
  $region5: #{residual_block_pallas.1} parent=0 // loop_body
    %s18 = ssub.s32 %s13, 1
    %s19 = ssub.s32 %s13, 2
    %s20 = sadd.s32 %s13, 1
    %s21 = ssub.s32 %s13, %s20
    %p22 = scmp.eq.s32.totalorder %s21, 0
    %s24 = sadd.s32 %s23, 1
    %s25 = scalar_select %p22, %s23, %s24
    %p28 = pneg %p22
    %p29 = scmp.eq.s32.totalorder %s13, 1
    %p30 = por %p28, %p29
    %p31 = scmp.ne.s32.totalorder %s23, %s26
    %p32 = scmp.eq.s32.totalorder %s13, 0
    %p33 = por %p31, %p32
    %p34 = scmp.ne.s32.totalorder %s23, %s26
    %p35 = scmp.eq.s32.totalorder %s18, 1
    %p36 = por %p34, %p35
    %p37 = scmp.ne.s32.totalorder %s26, %s27
    %p38 = scmp.eq.s32.totalorder %s18, 0
    %p39 = por %p37, %p38
    %p40 = scmp.ne.s32.totalorder %s26, %s27
    %p41 = scmp.eq.s32.totalorder %s19, 1
    %p42 = por %p40, %p41
    %p44 = scmp.ne.s32.totalorder %s27, %s43
    %p45 = scmp.eq.s32.totalorder %s19, 0
    %p46 = por %p44, %p45
    %s48 = sadd.s32 %s47, 1
    %p51 = scmp.eq.s32.totalorder %s13, 1
    %p52 = scmp.ne.s32.totalorder %s47, %s49
    %p53 = scmp.eq.s32.totalorder %s13, 0
    %p54 = por %p52, %p53
    %p55 = scmp.ne.s32.totalorder %s47, %s49
    %p56 = scmp.eq.s32.totalorder %s18, 1
    %p57 = por %p55, %p56
    %p58 = scmp.ne.s32.totalorder %s49, %s50
    %p59 = scmp.eq.s32.totalorder %s18, 0
    %p60 = por %p58, %p59
    %p61 = scmp.ne.s32.totalorder %s49, %s50
    %p62 = scmp.eq.s32.totalorder %s19, 1
    %p63 = por %p61, %p62
    %p65 = scmp.ne.s32.totalorder %s50, %s64
    %p66 = scmp.eq.s32.totalorder %s19, 0
    %p67 = por %p65, %p66
    %s69 = sadd.s32 %s68, 1
    %p72 = scmp.eq.s32.totalorder %s13, 1
    %p73 = scmp.ne.s32.totalorder %s68, %s70
    %p74 = scmp.eq.s32.totalorder %s13, 0
    %p75 = por %p73, %p74
    %p76 = scmp.ne.s32.totalorder %s68, %s70
    %p77 = scmp.eq.s32.totalorder %s18, 1
    %p78 = por %p76, %p77
    %p79 = scmp.ne.s32.totalorder %s70, %s71
    %p80 = scmp.eq.s32.totalorder %s18, 0
    %p81 = por %p79, %p80
    %p82 = scmp.ne.s32.totalorder %s70, %s71
    %p83 = scmp.eq.s32.totalorder %s19, 1
    %p84 = por %p82, %p83
    %p86 = scmp.ne.s32.totalorder %s71, %s85
    %p87 = scmp.eq.s32.totalorder %s19, 0
    %p88 = por %p86, %p87
    %s90 = sadd.s32 %s89, 1
    %p93 = scmp.eq.s32.totalorder %s13, 1
    %p94 = scmp.ne.s32.totalorder %s89, %s91
    %p95 = scmp.eq.s32.totalorder %s13, 0
    %p96 = por %p94, %p95
    %p97 = scmp.ne.s32.totalorder %s89, %s91
    %p98 = scmp.eq.s32.totalorder %s18, 1
    %p99 = por %p97, %p98
    %p100 = scmp.ne.s32.totalorder %s91, %s92
    %p101 = scmp.eq.s32.totalorder %s18, 0
    %p102 = por %p100, %p101
    %p103 = scmp.ne.s32.totalorder %s91, %s92
    %p104 = scmp.eq.s32.totalorder %s19, 1
    %p105 = por %p103, %p104
    %p107 = scmp.ne.s32.totalorder %s92, %s106
    %p108 = scmp.eq.s32.totalorder %s19, 0
    %p109 = por %p107, %p108
    %s111 = sadd.s32 %s110, 1
    %p114 = scmp.eq.s32.totalorder %s13, 1
    %p115 = scmp.ne.s32.totalorder %s110, %s112
    %p116 = scmp.eq.s32.totalorder %s13, 0
    %p117 = por %p115, %p116
    %p118 = scmp.ne.s32.totalorder %s110, %s112
    %p119 = scmp.eq.s32.totalorder %s18, 1
    %p120 = por %p118, %p119
    %p121 = scmp.ne.s32.totalorder %s112, %s113
    %p122 = scmp.eq.s32.totalorder %s18, 0
    %p123 = por %p121, %p122
    %p124 = scmp.ne.s32.totalorder %s112, %s113
    %p125 = scmp.eq.s32.totalorder %s19, 1
    %p126 = por %p124, %p125
    %p128 = scmp.ne.s32.totalorder %s113, %s127
    %p129 = scmp.eq.s32.totalorder %s19, 0
    %p130 = por %p128, %p129
    %s132 = sadd.s32 %s131, 1
    %p135 = scmp.eq.s32.totalorder %s13, 1
    %p136 = scmp.ne.s32.totalorder %s131, %s133
    %p137 = scmp.eq.s32.totalorder %s13, 0
    %p138 = por %p136, %p137
    %p139 = scmp.ne.s32.totalorder %s131, %s133
    %p140 = scmp.eq.s32.totalorder %s18, 1
    %p141 = por %p139, %p140
    %p142 = scmp.ne.s32.totalorder %s133, %s134
    %p143 = scmp.eq.s32.totalorder %s18, 0
    %p144 = por %p142, %p143
    %p145 = scmp.ne.s32.totalorder %s133, %s134
    %p146 = scmp.eq.s32.totalorder %s19, 1
    %p147 = por %p145, %p146
    %p149 = scmp.ne.s32.totalorder %s134, %s148
    %p150 = scmp.eq.s32.totalorder %s19, 0
    %p151 = por %p149, %p150
    %s153 = sadd.s32 %s152, 1
    %p156 = scmp.eq.s32.totalorder %s13, 1
    %p157 = scmp.ne.s32.totalorder %s152, %s154
    %p158 = scmp.eq.s32.totalorder %s13, 0
    %p159 = por %p157, %p158
    %p160 = scmp.ne.s32.totalorder %s152, %s154
    %p161 = scmp.eq.s32.totalorder %s18, 1
    %p162 = por %p160, %p161
    %p163 = scmp.ne.s32.totalorder %s154, %s155
    %p164 = scmp.eq.s32.totalorder %s18, 0
    %p165 = por %p163, %p164
    %p166 = scmp.ne.s32.totalorder %s154, %s155
    %p167 = scmp.eq.s32.totalorder %s19, 1
    %p168 = por %p166, %p167
    %p170 = scmp.ne.s32.totalorder %s155, %s169
    %p171 = scmp.eq.s32.totalorder %s19, 0
    %p172 = por %p170, %p171
    %s173 = ssub.s32 %s13, %s20
    %p174 = scmp.eq.s32.totalorder %s173, 0
    %s176 = sadd.s32 %s175, 1
    %s177 = scalar_select %p174, %s175, %s176
    %p180 = pneg %p174
    %p181 = scmp.eq.s32.totalorder %s13, 1
    %p182 = por %p180, %p181
    %p183 = scmp.ne.s32.totalorder %s175, %s178
    %p184 = scmp.eq.s32.totalorder %s13, 0
    %p185 = por %p183, %p184
    %p186 = scmp.ne.s32.totalorder %s175, %s178
    %p187 = scmp.eq.s32.totalorder %s18, 1
    %p188 = por %p186, %p187
    %p189 = scmp.ne.s32.totalorder %s178, %s179
    %p190 = scmp.eq.s32.totalorder %s18, 0
    %p191 = por %p189, %p190
    %p192 = scmp.ne.s32.totalorder %s178, %s179
    %p193 = scmp.eq.s32.totalorder %s19, 1
    %p194 = por %p192, %p193
    %p196 = scmp.ne.s32.totalorder %s179, %s195
    %p197 = scmp.eq.s32.totalorder %s19, 0
    %p198 = por %p196, %p197
    %p199 = scmp.le.s32.totalorder 1, %s13
    %p200 = scmp.lt.s32.totalorder %s13, 3
    %p201 = pnand %p199, %p200
    %p202 = pneg %p201
    // Predicated region
    $region9: #{residual_block_pallas.1} parent=5 // pred_check
      _
    $region10: #{residual_block_pallas.1} parent=5 // pred_check_branch
      %204 = sbr.rel (%p201) target = $region12
    $region11: #{residual_block_pallas.1} parent=5 // pred_region
      %s205 = ssub.s32 %s13, 1
      // Predicated region
      $region13: #{residual_block_pallas.1} parent=11 // pred_check
        %p206 = pneg %p60
      $region14: #{residual_block_pallas.1} parent=11 // pred_check_branch
        %208 = sbr.rel (%p206) target = $region16
      $region15: #{residual_block_pallas.1} parent=11 // pred_region
        _
      $region16: #{residual_block_pallas.1} parent=11 // pred_fallthru
        _
      // Predicated region
      $region17: #{residual_block_pallas.1} parent=11 // pred_check
        %p209 = pneg %p81
      $region18: #{residual_block_pallas.1} parent=11 // pred_check_branch
        %211 = sbr.rel (%p209) target = $region20
      $region19: #{residual_block_pallas.1} parent=11 // pred_region
        _
      $region20: #{residual_block_pallas.1} parent=11 // pred_fallthru
        _
      // Predicated region
      $region21: #{residual_block_pallas.1} parent=11 // pred_check
        %p212 = pneg %p102
      $region22: #{residual_block_pallas.1} parent=11 // pred_check_branch
        %214 = sbr.rel (%p212) target = $region24
      $region23: #{residual_block_pallas.1} parent=11 // pred_region
        _
      $region24: #{residual_block_pallas.1} parent=11 // pred_fallthru
        _
      // Predicated region
      $region25: #{residual_block_pallas.1} parent=11 // pred_check
        %p215 = pneg %p123
      $region26: #{residual_block_pallas.1} parent=11 // pred_check_branch
        %217 = sbr.rel (%p215) target = $region28
      $region27: #{residual_block_pallas.1} parent=11 // pred_region
        _
      $region28: #{residual_block_pallas.1} parent=11 // pred_fallthru
        _
      // Predicated region
      $region29: #{residual_block_pallas.1} parent=11 // pred_check
        %p218 = pneg %p144
      $region30: #{residual_block_pallas.1} parent=11 // pred_check_branch
        %220 = sbr.rel (%p218) target = $region32
      $region31: #{residual_block_pallas.1} parent=11 // pred_region
        _
      $region32: #{residual_block_pallas.1} parent=11 // pred_fallthru
        _
      // Predicated region
      $region33: #{residual_block_pallas.1} parent=11 // pred_check
        %p221 = pneg %p165
      $region34: #{residual_block_pallas.1} parent=11 // pred_check_branch
        %223 = sbr.rel (%p221) target = $region36
      $region35: #{residual_block_pallas.1} parent=11 // pred_region
        _
      $region36: #{residual_block_pallas.1} parent=11 // pred_fallthru
        _
    $region12: #{residual_block_pallas.1} parent=5 // pred_fallthru
      _
    %p224 = scmp.lt.s32.totalorder %s13, 2
    // Predicated region
    $region37: #{residual_block_pallas.1} parent=5 // pred_check
      %p225 = pneg %p224
    $region38: #{residual_block_pallas.1} parent=5 // pred_check_branch
      %227 = sbr.rel (%p225) target = $region40
    $region39: #{residual_block_pallas.1} parent=5 // pred_region
      // Predicated region
      $region41: #{residual_block_pallas.1} parent=39 // pred_check
        %p228 = pneg %p33
      $region42: #{residual_block_pallas.1} parent=39 // pred_check_branch
        %230 = sbr.rel (%p228) target = $region44
      $region43: #{residual_block_pallas.1} parent=39 // pred_region
        %p231 = scmp.lt.s32.totalorder %s13, 1
        %s232 = scalar_select %p231, %s13, 1
        %s233 = smul.addr %s232, 2
        %s234 = smul.addr %s233, 8
        %s235 = scalar_lea.vmem %s0, %s234
      $region44: #{residual_block_pallas.1} parent=39 // pred_fallthru
        _
    $region40: #{residual_block_pallas.1} parent=5 // pred_fallthru
      _
    %p236 = scmp.le.s32.totalorder 1, %s13
    %p237 = scmp.lt.s32.totalorder %s13, 3
    %p238 = pnand %p236, %p237
    %p239 = pneg %p238
    // Predicated region
    $region45: #{residual_block_pallas.1} parent=5 // pred_check
      _
    $region46: #{residual_block_pallas.1} parent=5 // pred_check_branch
      %241 = sbr.rel (%p238) target = $region48
    $region47: #{residual_block_pallas.1} parent=5 // pred_region
      %s242 = ssub.s32 %s13, 1
      %p243 = scmp.lt.s32.totalorder %s18, 1
      %s244 = scalar_select %p243, %s18, 1
      %s245 = smul.addr %s244, 2
      %s246 = smul.addr %s245, 8
      %s247 = scalar_lea.vmem %s0, %s246
      %p248 = pneg %p39
      %p249 = pneg %p36
      %p250 = pneg %p60
      %p251 = pneg %p57
      %p252 = pneg %p81
      %p253 = pneg %p78
      %p254 = pneg %p102
      %p255 = pneg %p99
      %p256 = pneg %p123
      %p257 = pneg %p120
      %p258 = pneg %p144
      %p259 = pneg %p141
      %p260 = pneg %p165
      %p261 = pneg %p162
      %p262 = pneg %p191
      %p263 = pneg %p188
      %p264 = scmp.lt.s32.totalorder %s18, 1
      %s265 = scalar_select %p264, %s18, 1
      %s266 = smul.addr %s265, 2
      %s267 = smul.addr %s266, 8
      %s268 = scalar_lea.vmem %s7, %s267
      %p269 = scmp.lt.s32.totalorder %s18, 1
      %s270 = scalar_select %p269, %s18, 1
      %s271 = smul.addr %s270, 2
      %s272 = smul.addr %s271, 8
      %s273 = scalar_lea.vmem %s0, %s272
      %p274 = scmp.lt.s32.totalorder %s18, 1
      %s275 = scalar_select %p274, %s18, 1
      %s276 = smul.addr %s275, 2
      %s277 = smul.addr %s276, 8
      %s278 = scalar_lea.vmem %s7, %s277
      %v279 = vld [vmem:[%s273] sm:$0xff]
      %v280 = vld [vmem:[%s273 + $0x8] sm:$0xff]
      %vm283 = vcmask 1040384
      %v284 = vrot.slane %v279, 7
      %v285 = vrot.slane %v280, 7
      %v286 = vsel %vm283, %v284, %v285
      %v288 = vsel %vm283, 0.0, %v284
      %vm289 = vcmask 1046528
      %v290 = vrot.slane %v279, 1
      %v291 = vrot.slane %v280, 1
      %v292 = vsel %vm289, %v290, %v291
      %v294 = vsel %vm289, %v291, 0.0
      %s295 = scalar_lea.vmem %s1, 64
      %v296 = vld [vmem:[%s295] sm:$0xff]
      %v297 = vld [vmem:[%s295 + $0x8] sm:$0xff]
      %v298 = vld [vmem:[%s295 + $0x10] sm:$0xff]
      %v299 = vld [vmem:[%s295 + $0x18] sm:$0xff]
      %v300 = vld [vmem:[%s295 + $0x20] sm:$0xff]
      %v301 = vld [vmem:[%s295 + $0x28] sm:$0xff]
      %v302 = vld [vmem:[%s295 + $0x30] sm:$0xff]
      %v303 = vld [vmem:[%s295 + $0x38] sm:$0xff]
      %v304 = vld [vmem:[%s1] sm:$0xff]
      %v305 = vld [vmem:[%s1 + $0x8] sm:$0xff]
      %v306 = vld [vmem:[%s1 + $0x10] sm:$0xff]
      %v307 = vld [vmem:[%s1 + $0x18] sm:$0xff]
      %v308 = vld [vmem:[%s1 + $0x20] sm:$0xff]
      %v309 = vld [vmem:[%s1 + $0x28] sm:$0xff]
      %v310 = vld [vmem:[%s1 + $0x30] sm:$0xff]
      %v311 = vld [vmem:[%s1 + $0x38] sm:$0xff]
      %vm312 = vcmask 523264
      %v314 = vsel %vm312, %v288, 0
      %v316 = vsel %vm312, %v286, 0
      %318 = vmatpush.msra.mxu0 0.0
      %319 = vmatpush.msra.mxu0 0.0
      %320 = vmatpush.msra.mxu0 0.0
      %321 = vmatpush.msra.mxu0 0.0
      %322 = vmatpush.msra.mxu0 0.0
      %323 = vmatpush.msra.mxu0 0.0
      %324 = vmatpush.msra.mxu0 0.0
      %325 = vmatpush.msra.mxu0 0.0
      %326 = vmatpush.msra.mxu0 %v311
      %327 = vmatpush.msra.mxu0 %v310
      %328 = vmatpush.msra.mxu0 %v309
      %329 = vmatpush.msra.mxu0 %v308
      %330 = vmatpush.msra.mxu0 %v307
      %331 = vmatpush.msra.mxu0 %v306
      %332 = vmatpush.msra.mxu0 %v305
      %333 = vmatpush.msra.mxu0 %v304
      %334 = vmatmul.f32.gmra.mxu0 %v314
      %v335 = vpop.f32.mrf.mxu0
      %v336 = vadd.f32 0.0, %v335
      %337 = vmatmul.f32.gmra.mxu0 %v316
      %v338 = vpop.f32.mrf.mxu0
      %v339 = vadd.f32 0.0, %v338
      %340 = vdwg.mxu0
      %v341 = vsel %vm312, %v279, 0
      %v343 = vsel %vm312, %v280, 0
      %345 = vmatpush.msra.mxu0 0.0
      %346 = vmatpush.msra.mxu0 0.0
      %347 = vmatpush.msra.mxu0 0.0
      %348 = vmatpush.msra.mxu0 0.0
      %349 = vmatpush.msra.mxu0 0.0
      %350 = vmatpush.msra.mxu0 0.0
      %351 = vmatpush.msra.mxu0 0.0
      %352 = vmatpush.msra.mxu0 0.0
      %353 = vmatpush.msra.mxu0 %v303
      %354 = vmatpush.msra.mxu0 %v302
      %355 = vmatpush.msra.mxu0 %v301
      %356 = vmatpush.msra.mxu0 %v300
      %357 = vmatpush.msra.mxu0 %v299
      %358 = vmatpush.msra.mxu0 %v298
      %359 = vmatpush.msra.mxu0 %v297
      %360 = vmatpush.msra.mxu0 %v296
      %361 = vmatmul.f32.gmra.mxu0 %v341
      %v362 = vpop.f32.mrf.mxu0
      %v363 = vadd.f32 %v336, %v362
      %364 = vmatmul.f32.gmra.mxu0 %v343
      %v365 = vpop.f32.mrf.mxu0
      %v366 = vadd.f32 %v339, %v365
      %367 = vdwg.mxu0
      %s368 = scalar_lea.vmem %s1, 128
      %v369 = vld [vmem:[%s368] sm:$0xff]
      %v370 = vld [vmem:[%s368 + $0x8] sm:$0xff]
      %v371 = vld [vmem:[%s368 + $0x10] sm:$0xff]
      %v372 = vld [vmem:[%s368 + $0x18] sm:$0xff]
      %v373 = vld [vmem:[%s368 + $0x20] sm:$0xff]
      %v374 = vld [vmem:[%s368 + $0x28] sm:$0xff]
      %v375 = vld [vmem:[%s368 + $0x30] sm:$0xff]
      %v376 = vld [vmem:[%s368 + $0x38] sm:$0xff]
      %v377 = vsel %vm312, %v292, 0
      %v380 = vsel %vm312, %v294, 0
      %382 = vmatpush.msra.mxu0 0.0
      %383 = vmatpush.msra.mxu0 0.0
      %384 = vmatpush.msra.mxu0 0.0
      %385 = vmatpush.msra.mxu0 0.0
      %386 = vmatpush.msra.mxu0 0.0
      %387 = vmatpush.msra.mxu0 0.0
      %388 = vmatpush.msra.mxu0 0.0
      %389 = vmatpush.msra.mxu0 0.0
      %390 = vmatpush.msra.mxu0 %v376
      %391 = vmatpush.msra.mxu0 %v375
      %392 = vmatpush.msra.mxu0 %v374
      %393 = vmatpush.msra.mxu0 %v373
      %394 = vmatpush.msra.mxu0 %v372
      %395 = vmatpush.msra.mxu0 %v371
      %396 = vmatpush.msra.mxu0 %v370
      %397 = vmatpush.msra.mxu0 %v369
      %398 = vmatmul.f32.gmra.mxu0 %v377
      %v399 = vpop.f32.mrf.mxu0
      %v400 = vadd.f32 0.0, %v399
      %401 = vmatmul.f32.gmra.mxu0 %v380
      %v402 = vpop.f32.mrf.mxu0
      %v403 = vadd.f32 0.0, %v402
      %404 = vdwg.mxu0
      %v405 = vadd.f32 %v363, %v400
      %v406 = vadd.f32 %v366, %v403
      %v407 = vld [vmem:[%s2] sm:$0x1]
      %v409 = vperm.slane %v407, 0
      %v411 = vadd.f32 %v405, %v409
      %v412 = vadd.f32 %v406, %v409
      %vm413 = vcmp.gt.f32.partialorder %v411, 0.0
      %vm414 = vcmp.gt.f32.partialorder %v412, 0.0
      %v415 = vmul.f32 %v411, 0.3
      %v416 = vmul.f32 %v412, 0.3
      %v417 = vsel %vm413, %v411, %v415
      %v418 = vsel %vm414, %v412, %v416
      %v421 = vrot.slane %v417, 7
      %v422 = vrot.slane %v418, 7
      %v423 = vsel %vm283, %v421, %v422
      %v426 = vsel %vm283, 0.0, %v421
      %v427 = vrot.slane %v417, 1
      %v428 = vrot.slane %v418, 1
      %v429 = vsel %vm289, %v427, %v428
      %v432 = vsel %vm289, %v428, 0.0
      %s433 = scalar_lea.vmem %s3, 128
      %v434 = vld [vmem:[%s433] sm:$0xff]
      %v435 = vld [vmem:[%s433 + $0x8] sm:$0xff]
      %v436 = vld [vmem:[%s433 + $0x10] sm:$0xff]
      %v437 = vld [vmem:[%s433 + $0x18] sm:$0xff]
      %v438 = vld [vmem:[%s433 + $0x20] sm:$0xff]
      %v439 = vld [vmem:[%s433 + $0x28] sm:$0xff]
      %v440 = vld [vmem:[%s433 + $0x30] sm:$0xff]
      %v441 = vld [vmem:[%s433 + $0x38] sm:$0xff]
      %v442 = vld [vmem:[%s433 + $0x40] sm:$0xff]
      %v443 = vld [vmem:[%s433 + $0x48] sm:$0xff]
      %v444 = vld [vmem:[%s433 + $0x50] sm:$0xff]
      %v445 = vld [vmem:[%s433 + $0x58] sm:$0xff]
      %v446 = vld [vmem:[%s433 + $0x60] sm:$0xff]
      %v447 = vld [vmem:[%s433 + $0x68] sm:$0xff]
      %v448 = vld [vmem:[%s433 + $0x70] sm:$0xff]
      %v449 = vld [vmem:[%s433 + $0x78] sm:$0xff]
      %v450 = vld [vmem:[%s3] sm:$0xff]
      %v451 = vld [vmem:[%s3 + $0x8] sm:$0xff]
      %v452 = vld [vmem:[%s3 + $0x10] sm:$0xff]
      %v453 = vld [vmem:[%s3 + $0x18] sm:$0xff]
      %v454 = vld [vmem:[%s3 + $0x20] sm:$0xff]
      %v455 = vld [vmem:[%s3 + $0x28] sm:$0xff]
      %v456 = vld [vmem:[%s3 + $0x30] sm:$0xff]
      %v457 = vld [vmem:[%s3 + $0x38] sm:$0xff]
      %v458 = vld [vmem:[%s3 + $0x40] sm:$0xff]
      %v459 = vld [vmem:[%s3 + $0x48] sm:$0xff]
      %v460 = vld [vmem:[%s3 + $0x50] sm:$0xff]
      %v461 = vld [vmem:[%s3 + $0x58] sm:$0xff]
      %v462 = vld [vmem:[%s3 + $0x60] sm:$0xff]
      %v463 = vld [vmem:[%s3 + $0x68] sm:$0xff]
      %v464 = vld [vmem:[%s3 + $0x70] sm:$0xff]
      %v465 = vld [vmem:[%s3 + $0x78] sm:$0xff]
      %466 = vmatpush.msra.mxu0 %v465
      %467 = vmatpush.msra.mxu0 %v464
      %468 = vmatpush.msra.mxu0 %v463
      %469 = vmatpush.msra.mxu0 %v462
      %470 = vmatpush.msra.mxu0 %v461
      %471 = vmatpush.msra.mxu0 %v460
      %472 = vmatpush.msra.mxu0 %v459
      %473 = vmatpush.msra.mxu0 %v458
      %474 = vmatpush.msra.mxu0 %v457
      %475 = vmatpush.msra.mxu0 %v456
      %476 = vmatpush.msra.mxu0 %v455
      %477 = vmatpush.msra.mxu0 %v454
      %478 = vmatpush.msra.mxu0 %v453
      %479 = vmatpush.msra.mxu0 %v452
      %480 = vmatpush.msra.mxu0 %v451
      %481 = vmatpush.msra.mxu0 %v450
      %482 = vmatmul.f32.gmra.mxu0 %v426
      %v483 = vpop.f32.mrf.mxu0
      %v484 = vadd.f32 0.0, %v483
      %485 = vmatmul.f32.gmra.mxu0 %v423
      %v486 = vpop.f32.mrf.mxu0
      %v487 = vadd.f32 0.0, %v486
      %488 = vdwg.mxu0
      %489 = vmatpush.msra.mxu0 %v449
      %490 = vmatpush.msra.mxu0 %v448
      %491 = vmatpush.msra.mxu0 %v447
      %492 = vmatpush.msra.mxu0 %v446
      %493 = vmatpush.msra.mxu0 %v445
      %494 = vmatpush.msra.mxu0 %v444
      %495 = vmatpush.msra.mxu0 %v443
      %496 = vmatpush.msra.mxu0 %v442
      %497 = vmatpush.msra.mxu0 %v441
      %498 = vmatpush.msra.mxu0 %v440
      %499 = vmatpush.msra.mxu0 %v439
      %500 = vmatpush.msra.mxu0 %v438
      %501 = vmatpush.msra.mxu0 %v437
      %502 = vmatpush.msra.mxu0 %v436
      %503 = vmatpush.msra.mxu0 %v435
      %504 = vmatpush.msra.mxu0 %v434
      %505 = vmatmul.f32.gmra.mxu0 %v417
      %v506 = vpop.f32.mrf.mxu0
      %v507 = vadd.f32 %v484, %v506
      %508 = vmatmul.f32.gmra.mxu0 %v418
      %v509 = vpop.f32.mrf.mxu0
      %v510 = vadd.f32 %v487, %v509
      %511 = vdwg.mxu0
      %s512 = scalar_lea.vmem %s3, 256
      %v513 = vld [vmem:[%s512] sm:$0xff]
      %v514 = vld [vmem:[%s512 + $0x8] sm:$0xff]
      %v515 = vld [vmem:[%s512 + $0x10] sm:$0xff]
      %v516 = vld [vmem:[%s512 + $0x18] sm:$0xff]
      %v517 = vld [vmem:[%s512 + $0x20] sm:$0xff]
      %v518 = vld [vmem:[%s512 + $0x28] sm:$0xff]
      %v519 = vld [vmem:[%s512 + $0x30] sm:$0xff]
      %v520 = vld [vmem:[%s512 + $0x38] sm:$0xff]
      %v521 = vld [vmem:[%s512 + $0x40] sm:$0xff]
      %v522 = vld [vmem:[%s512 + $0x48] sm:$0xff]
      %v523 = vld [vmem:[%s512 + $0x50] sm:$0xff]
      %v524 = vld [vmem:[%s512 + $0x58] sm:$0xff]
      %v525 = vld [vmem:[%s512 + $0x60] sm:$0xff]
      %v526 = vld [vmem:[%s512 + $0x68] sm:$0xff]
      %v527 = vld [vmem:[%s512 + $0x70] sm:$0xff]
      %v528 = vld [vmem:[%s512 + $0x78] sm:$0xff]
      %529 = vmatpush.msra.mxu0 %v528
      %530 = vmatpush.msra.mxu0 %v527
      %531 = vmatpush.msra.mxu0 %v526
      %532 = vmatpush.msra.mxu0 %v525
      %533 = vmatpush.msra.mxu0 %v524
      %534 = vmatpush.msra.mxu0 %v523
      %535 = vmatpush.msra.mxu0 %v522
      %536 = vmatpush.msra.mxu0 %v521
      %537 = vmatpush.msra.mxu0 %v520
      %538 = vmatpush.msra.mxu0 %v519
      %539 = vmatpush.msra.mxu0 %v518
      %540 = vmatpush.msra.mxu0 %v517
      %541 = vmatpush.msra.mxu0 %v516
      %542 = vmatpush.msra.mxu0 %v515
      %543 = vmatpush.msra.mxu0 %v514
      %544 = vmatpush.msra.mxu0 %v513
      %545 = vmatmul.f32.gmra.mxu0 %v429
      %v546 = vpop.f32.mrf.mxu0
      %v547 = vadd.f32 0.0, %v546
      %548 = vmatmul.f32.gmra.mxu0 %v432
      %v549 = vpop.f32.mrf.mxu0
      %v550 = vadd.f32 0.0, %v549
      %551 = vdwg.mxu0
      %v552 = vadd.f32 %v507, %v547
      %v553 = vadd.f32 %v510, %v550
      %v554 = vld [vmem:[%s4] sm:$0x1]
      %v556 = vperm.slane %v554, 0
      %v558 = vadd.f32 %v552, %v556
      %v559 = vadd.f32 %v553, %v556
      %vm560 = vcmp.gt.f32.partialorder %v558, 0.0
      %vm561 = vcmp.gt.f32.partialorder %v559, 0.0
      %v562 = vmul.f32 %v558, 0.3
      %v563 = vmul.f32 %v559, 0.3
      %v564 = vsel %vm560, %v558, %v562
      %v565 = vsel %vm561, %v559, %v563
      %v566 = vld [vmem:[%s5] sm:$0xff]
      %v567 = vld [vmem:[%s5 + $0x8] sm:$0xff]
      %v568 = vld [vmem:[%s5 + $0x10] sm:$0xff]
      %v569 = vld [vmem:[%s5 + $0x18] sm:$0xff]
      %v570 = vld [vmem:[%s5 + $0x20] sm:$0xff]
      %v571 = vld [vmem:[%s5 + $0x28] sm:$0xff]
      %v572 = vld [vmem:[%s5 + $0x30] sm:$0xff]
      %v573 = vld [vmem:[%s5 + $0x38] sm:$0xff]
      %v574 = vld [vmem:[%s6] sm:$0x1]
      %v576 = vperm.slane %v574, 0
      %578 = vmatpush.msra.mxu0 0.0
      %579 = vmatpush.msra.mxu0 0.0
      %580 = vmatpush.msra.mxu0 0.0
      %581 = vmatpush.msra.mxu0 0.0
      %582 = vmatpush.msra.mxu0 0.0
      %583 = vmatpush.msra.mxu0 0.0
      %584 = vmatpush.msra.mxu0 0.0
      %585 = vmatpush.msra.mxu0 0.0
      %586 = vmatpush.msra.mxu0 %v573
      %587 = vmatpush.msra.mxu0 %v572
      %588 = vmatpush.msra.mxu0 %v571
      %589 = vmatpush.msra.mxu0 %v570
      %590 = vmatpush.msra.mxu0 %v569
      %591 = vmatpush.msra.mxu0 %v568
      %592 = vmatpush.msra.mxu0 %v567
      %593 = vmatpush.msra.mxu0 %v566
      %594 = vmatmul.f32.gmra.mxu0 %v341
      %v595 = vpop.f32.mrf.mxu0
      %v596 = vadd.f32 %v576, %v595
      %597 = vmatmul.f32.gmra.mxu0 %v343
      %v598 = vpop.f32.mrf.mxu0
      %v599 = vadd.f32 %v576, %v598
      %600 = vdwg.mxu0
      %v601 = vadd.f32 %v564, %v596
      %v602 = vadd.f32 %v565, %v599
      %603 = vst [vmem:[%s278] sm:$0xff] %v601
      %604 = vst [vmem:[%s278 + $0x8] sm:$0xff] %v602
      %p605 = scmp.lt.s32.totalorder %s18, 1
      %s606 = scalar_select %p605, %s18, 1
      %s607 = smul.addr %s606, 2
      %s608 = smul.addr %s607, 8
      %s609 = scalar_lea.vmem %s7, %s608
      // Predicated region
      $region49: #{residual_block_pallas.1} parent=47 // pred_check
        %p610 = pneg %p188
      $region50: #{residual_block_pallas.1} parent=47 // pred_check_branch
        %612 = sbr.rel (%p610) target = $region52
      $region51: #{residual_block_pallas.1} parent=47 // pred_region
        _
      $region52: #{residual_block_pallas.1} parent=47 // pred_fallthru
        _
    $region48: #{residual_block_pallas.1} parent=5 // pred_fallthru
      _
    %p613 = scmp.le.s32.totalorder 2, %s13
    // Predicated region
    $region53: #{residual_block_pallas.1} parent=5 // pred_check
      %p614 = pneg %p613
    $region54: #{residual_block_pallas.1} parent=5 // pred_check_branch
      %616 = sbr.rel (%p614) target = $region56
    $region55: #{residual_block_pallas.1} parent=5 // pred_region
      %s617 = ssub.s32 %s13, 2
      // Predicated region
      $region57: #{residual_block_pallas.1} parent=55 // pred_check
        %p618 = pneg %p194
      $region58: #{residual_block_pallas.1} parent=55 // pred_check_branch
        %620 = sbr.rel (%p618) target = $region60
      $region59: #{residual_block_pallas.1} parent=55 // pred_region
        %p621 = scmp.lt.s32.totalorder %s19, 1
        %s622 = scalar_select %p621, %s19, 1
        %s623 = smul.addr %s622, 2
        %s624 = smul.addr %s623, 8
        %s625 = scalar_lea.vmem %s7, %s624
      $region60: #{residual_block_pallas.1} parent=55 // pred_fallthru
        _
    $region56: #{residual_block_pallas.1} parent=5 // pred_fallthru
      _
  $region6: #{residual_block_pallas.1} parent=0 // loop_footer
    %s17 = sadd.s32 1, %s13
  $region7: #{residual_block_pallas.1} parent=0 // loop_footer_branch
    %12 = sbr.rel target = $region3
  $region8: #{residual_block_pallas.1} parent=0 // loop_exit
    _

</llo_original>
